<compile_context>
chip_gen: v7x
topology: tpu7x:2x2x1
jax: 0.10.0
libtpu: 0.0.40
codegen_flags: <defaults>
</compile_context>

<pallas_src>
import jax
import jax.numpy as jnp
from jax.experimental import pallas as pl
from jax.experimental.pallas import tpu as pltpu

# ----------------------------- problem sizes -----------------------------
B = 2            # batch
T = 264          # audio samples
K = 16           # encoder kernel size
S = 8            # encoder stride
F_BINS = 32      # "frequency" bins (encoder has 2*F_BINS filters: re + im)
H = 32           # masker hidden size
L = (T - K) // S + 1         # number of frames = 32


# ------------------------------- kernel ----------------------------------
def e2e_kernel(frames_ref, wenc_ref, w1_ref, p_ref, out_ref):
    # frames_ref : (B*L, K)  pre-framed audio (one row per frame)
    # wenc_ref   : (K, 2F)   encoder filterbank (Conv1d weight (2F,1,K) transposed)
    # w1_ref     : (F, H)    masker hidden weight
    # p_ref      : (3, H)    packed small params: row0=b1, row1=w2^T, row2[0]=b2
    # out_ref    : (B, 1)    MOS for the whole batch (single store)

    # Encoder Conv1d (stride S) == one frames x filterbank matmul on the MXU.
    tf = jnp.dot(frames_ref[...], wenc_ref[...],
                 preferred_element_type=jnp.float32)          # (B*L, 2F)

    # mag(): split channels into real / imag halves, magnitude per bin.
    re = tf[:, :F_BINS]
    im = tf[:, F_BINS:]
    mag = jnp.sqrt(re * re + im * im)                         # (B*L, F)

    p = p_ref[...]                                            # (3, H)
    b1 = p[0:1, :]                                            # (1, H)
    w2t = p[1:2, :]                                           # (1, H)
    b2 = p[2:3, 0:1]                                          # (1, 1)

    # Masker / MOS head: per-frame MLP + ReLU (batched over all B*L rows).
    h = jnp.dot(mag, w1_ref[...],
                preferred_element_type=jnp.float32) + b1      # (B*L, H)
    h = jnp.maximum(h, 0.0)

    # Mean-pool over frames per batch element (layout-preserving reshape).
    pooled = jnp.mean(h.reshape(B, L, H), axis=1)             # (B, H)

    # Final (H -> 1) head as VPU multiply + cross-lane reduce (no N=1 matmul).
    mos = jnp.sum(pooled * w2t, axis=-1, keepdims=True) + b2  # (B, 1)
    out_ref[...] = mos


@jax.jit
def model_e2e_forward(x, w_enc, w1, b1, w2, b2):
    """x: (B, T) float32 audio (or (B,1,T)). Returns MOS (B, 1)."""
    if x.ndim == 3:            # mirror the .unsqueeze(1) convention: accept (B,1,T)
        x = x[:, 0, :]

    # Frame the audio in the wrapper: frames is only B*L*K*4 = 4 KiB, and its
    # construction fuses into the input copy -- the kernel never slices audio.
    idx = jnp.arange(L)[:, None] * S + jnp.arange(K)[None, :]     # (L, K)
    frames = x[:, idx].reshape(B * L, K)                          # (B*L, K)

    # Pack the three tiny parameters into one padded VMEM tile (one DMA).
    p = jnp.zeros((3, H), jnp.float32)
    p = p.at[0, :].set(b1.reshape(H))
    p = p.at[1, :].set(w2.reshape(H))
    p = p.at[2, 0].set(b2.reshape(()))

    vmem = pl.BlockSpec(memory_space=pltpu.MemorySpace.VMEM)  # whole array in VMEM
    return pl.pallas_call(
        e2e_kernel,
        out_shape=jax.ShapeDtypeStruct((B, 1), jnp.float32),
        in_specs=[vmem] * 4,
        out_specs=vmem,
    )(frames, w_enc, w1, p)


# ------------------------------ reference --------------------------------
def reference_forward(x, w_enc, w1, b1, w2, b2):
    idx = jnp.arange(L)[:, None] * S + jnp.arange(K)[None, :]
    frames = x[:, idx]                                   # (B, L, K)
    tf_rep = jnp.einsum("blk,kf->blf", frames, w_enc)    # (B, L, 2F)
    re, im = tf_rep[..., :F_BINS], tf_rep[..., F_BINS:]
    mag = jnp.sqrt(re * re + im * im)
    h = jnp.maximum(jnp.einsum("blf,fh->blh", mag, w1) + b1, 0.0)
    pooled = jnp.mean(h, axis=1)                         # (B, H)
    return pooled @ w2 + b2                              # (B, 1)


# --------------------------------- main -----------------------------------
if __name__ == "__main__":
    key = jax.random.PRNGKey(0)
    kx, ke, k1, kb1, k2, kb2 = jax.random.split(key, 6)

    x = jax.random.normal(kx, (B, T), dtype=jnp.float32)

    # Deterministic parameter init (synthetic; no checkpoint loading).
    w_enc = jax.random.normal(ke, (K, 2 * F_BINS), dtype=jnp.float32) * 0.1
    w1 = jax.random.normal(k1, (F_BINS, H), dtype=jnp.float32) * 0.1
    b1 = jax.random.normal(kb1, (1, H), dtype=jnp.float32) * 0.01
    w2 = jax.random.normal(k2, (H, 1), dtype=jnp.float32) * 0.1
    b2 = jax.random.normal(kb2, (1, 1), dtype=jnp.float32) * 0.01

    out = model_e2e_forward(x, w_enc, w1, b1, w2, b2)
    out = jax.block_until_ready(out)

    ref = reference_forward(x, w_enc, w1, b1, w2, b2)
    assert out.shape == (B, 1)
    assert jnp.allclose(out, ref, atol=1e-4, rtol=1e-4), (out, ref)

    # TODO(synk): encoder/masker are ctor-injected in the original module; a
    # Conv1d filterbank + MLP MOS head is used here as the concrete instance.
    print("KERNEL_OK")
</pallas_src>

<mosaic_0001>
module attributes {stable_mosaic.version = 11 : i64} {
  func.func @e2e_kernel(%arg0: memref<64x16xf32, #tpu.memory_space<vmem>>, %arg1: memref<16x64xf32, #tpu.memory_space<vmem>>, %arg2: memref<32x32xf32, #tpu.memory_space<vmem>>, %arg3: memref<3x32xf32, #tpu.memory_space<vmem>>, %arg4: memref<2x1xf32, #tpu.memory_space<vmem>>) attributes {dimension_semantics = [], scalar_prefetch = 0 : i64, scratch_operands = 0 : i64, tpu.core_type = #tpu.core_type<tc>} {
    %c0 = arith.constant 0 : index
    %c0_0 = arith.constant 0 : index
    %0 = vector.load %arg0[%c0, %c0_0] : memref<64x16xf32, #tpu.memory_space<vmem>>, vector<64x16xf32>
    %c0_1 = arith.constant 0 : index
    %c0_2 = arith.constant 0 : index
    %1 = vector.load %arg1[%c0_1, %c0_2] : memref<16x64xf32, #tpu.memory_space<vmem>>, vector<16x64xf32>
    %cst = arith.constant dense<0.000000e+00> : vector<64x64xf32>
    %2 = tpu.matmul %0, %1, %cst {dimension_numbers = #tpu.dot_dimension_numbers<[1], [0], [0], [1], [0, 0, 1, 1], [], []>} : vector<64x16xf32>, vector<16x64xf32>, vector<64x64xf32> -> vector<64x64xf32>
    %3 = vector.extract_strided_slice %2 {offsets = [0, 0], sizes = [64, 32], strides = [1, 1]} : vector<64x64xf32> to vector<64x32xf32>
    %4 = vector.extract_strided_slice %2 {offsets = [0, 32], sizes = [64, 32], strides = [1, 1]} : vector<64x64xf32> to vector<64x32xf32>
    %5 = arith.mulf %3, %3 : vector<64x32xf32>
    %6 = arith.mulf %4, %4 : vector<64x32xf32>
    %7 = arith.addf %5, %6 : vector<64x32xf32>
    %8 = math.sqrt %7 : vector<64x32xf32>
    %c0_3 = arith.constant 0 : index
    %c0_4 = arith.constant 0 : index
    %9 = vector.load %arg3[%c0_3, %c0_4] : memref<3x32xf32, #tpu.memory_space<vmem>>, vector<3x32xf32>
    %10 = vector.extract_strided_slice %9 {offsets = [0, 0], sizes = [1, 32], strides = [1, 1]} : vector<3x32xf32> to vector<1x32xf32>
    %11 = vector.extract_strided_slice %9 {offsets = [1, 0], sizes = [1, 32], strides = [1, 1]} : vector<3x32xf32> to vector<1x32xf32>
    %12 = vector.extract_strided_slice %9 {offsets = [2, 0], sizes = [1, 1], strides = [1, 1]} : vector<3x32xf32> to vector<1x1xf32>
    %c0_5 = arith.constant 0 : index
    %c0_6 = arith.constant 0 : index
    %13 = vector.load %arg2[%c0_5, %c0_6] : memref<32x32xf32, #tpu.memory_space<vmem>>, vector<32x32xf32>
    %cst_7 = arith.constant dense<0.000000e+00> : vector<64x32xf32>
    %14 = tpu.matmul %8, %13, %cst_7 {dimension_numbers = #tpu.dot_dimension_numbers<[1], [0], [0], [1], [0, 0, 1, 1], [], []>} : vector<64x32xf32>, vector<32x32xf32>, vector<64x32xf32> -> vector<64x32xf32>
    %15 = vector.broadcast %10 : vector<1x32xf32> to vector<64x32xf32>
    %16 = arith.addf %14, %15 : vector<64x32xf32>
    %cst_8 = arith.constant 0.000000e+00 : f32
    %17 = vector.broadcast %cst_8 : f32 to vector<64x32xf32>
    %18 = arith.maximumf %16, %17 : vector<64x32xf32>
    %19 = vector.shape_cast %18 : vector<64x32xf32> to vector<2x32x32xf32>
    %cst_9 = arith.constant dense<0.000000e+00> : vector<2x32xf32>
    %20 = vector.multi_reduction <add>, %19, %cst_9 [1] : vector<2x32x32xf32> to vector<2x32xf32>
    %cst_10 = arith.constant 3.200000e+01 : f32
    %21 = vector.broadcast %cst_10 : f32 to vector<2x32xf32>
    %22 = arith.divf %20, %21 : vector<2x32xf32>
    %23 = vector.broadcast %11 : vector<1x32xf32> to vector<2x32xf32>
    %24 = arith.mulf %22, %23 : vector<2x32xf32>
    %cst_11 = arith.constant dense<0.000000e+00> : vector<2xf32>
    %25 = vector.multi_reduction <add>, %24, %cst_11 [1] : vector<2x32xf32> to vector<2xf32>
    %26 = vector.shape_cast %25 : vector<2xf32> to vector<2x1xf32>
    %27 = vector.broadcast %12 : vector<1x1xf32> to vector<2x1xf32>
    %28 = arith.addf %26, %27 : vector<2x1xf32>
    %c0_12 = arith.constant 0 : index
    %c0_13 = arith.constant 0 : index
    %29 = vector.load %arg4[%c0_12, %c0_13] : memref<2x1xf32, #tpu.memory_space<vmem>>, vector<2x1xf32>
    tpu.vector_store %arg4[%c0_12, %c0_13], %28 {strides = array<i32>} : memref<2x1xf32, #tpu.memory_space<vmem>>, vector<2x1xf32>,
    return
  }
}

</mosaic_0001>

<llo_original>
// kernel: model_e2e_forward.1
$region0: #{model_e2e_forward.1}
  #allocation0 [shape = 'u32[]', space=smem, size = 0x4, offset = 0x4, fixed_abs, tag = 'smem constant byte address 0x4 - core index']
  #allocation1 [shape = 'u32[144,128]{1,0:T(1,128)}', space=vmem, size = 0x12000, scoped, tag = 'internal scratch']
  %s0 = inlined_call_operand.vmem [shape: f32[64,16], index: 0, kind: input, shape index: {}]
  %s1 = inlined_call_operand.vmem [shape: f32[16,64], index: 1, kind: input, shape index: {}]
  %s2 = inlined_call_operand.vmem [shape: f32[32,32], index: 2, kind: input, shape index: {}]
  %s3 = inlined_call_operand.vmem [shape: f32[3,32], index: 3, kind: input, shape index: {}]
  %s4 = inlined_call_operand.vmem [shape: f32[2,1], index: 4, kind: output, shape index: {}]
  %s5 = sld [smem:[#allocation0]]
  $region26: #{model_e2e_forward.1} parent=0
    _
  %s7 = ssub.s32 1, %s5
  %s8 = scalar_select 0, %s7, %s5
  // Predicated region
  $region2: #{model_e2e_forward.1} parent=0 // pred_check
    _
  $region3: #{model_e2e_forward.1} parent=0 // pred_check_branch
    %10 = sbr.rel (0) target = $region5
  $region4: #{model_e2e_forward.1} parent=0 // pred_region
    _
  $region5: #{model_e2e_forward.1} parent=0 // pred_fallthru
    _
  // Predicated region
  $region6: #{model_e2e_forward.1} parent=0 // pred_check
    _
  $region7: #{model_e2e_forward.1} parent=0 // pred_check_branch
    %12 = sbr.rel (0) target = $region9
  $region8: #{model_e2e_forward.1} parent=0 // pred_region
    _
  $region9: #{model_e2e_forward.1} parent=0 // pred_fallthru
    _
  // Predicated region
  $region10: #{model_e2e_forward.1} parent=0 // pred_check
    _
  $region11: #{model_e2e_forward.1} parent=0 // pred_check_branch
    %14 = sbr.rel (0) target = $region13
  $region12: #{model_e2e_forward.1} parent=0 // pred_region
    _
  $region13: #{model_e2e_forward.1} parent=0 // pred_fallthru
    _
  // Predicated region
  $region14: #{model_e2e_forward.1} parent=0 // pred_check
    _
  $region15: #{model_e2e_forward.1} parent=0 // pred_check_branch
    %16 = sbr.rel (0) target = $region17
  $region16: #{model_e2e_forward.1} parent=0 // pred_region
    _
  $region17: #{model_e2e_forward.1} parent=0 // pred_fallthru
    _
  %v17 = vld [vmem:[%s0] sm:$0xff]
  %v18 = vld [vmem:[%s0 + $0x8] sm:$0xff]
  %v19 = vld [vmem:[%s0 + $0x10] sm:$0xff]
  %v20 = vld [vmem:[%s0 + $0x18] sm:$0xff]
  %v21 = vld [vmem:[%s0 + $0x20] sm:$0xff]
  %v22 = vld [vmem:[%s0 + $0x28] sm:$0xff]
  %v23 = vld [vmem:[%s0 + $0x30] sm:$0xff]
  %v24 = vld [vmem:[%s0 + $0x38] sm:$0xff]
  %v25 = vld [vmem:[%s1] sm:$0xff]
  %v26 = vld [vmem:[%s1 + $0x8] sm:$0xff]
  %vm27 = vcmask 130048
  %v29 = vsel %vm27, %v17, 0
  %v32 = vsel %vm27, %v18, 0
  %v35 = vsel %vm27, %v19, 0
  %v38 = vsel %vm27, %v20, 0
  %v41 = vsel %vm27, %v21, 0
  %v44 = vsel %vm27, %v22, 0
  %v47 = vsel %vm27, %v23, 0
  %v50 = vsel %vm27, %v24, 0
  %52 = vmatprep.subr.mxu0 0.0
  %53 = vmatpush1.msra.mxu0 %v25
  %54 = vmatprep.subr.mxu0 0.0
  %55 = vmatpush1.msra.mxu0 %v26
  %56 = vmatprep.subr.mxu0 0.0
  %57 = vmatpush1.msra.mxu0 0.0
  %58 = vmatprep.subr.mxu0 0.0
  %59 = vmatpush1.msra.mxu0 0.0
  %60 = vmatprep.subr.mxu0 0.0
  %61 = vmatpush1.msra.mxu0 0.0
  %62 = vmatprep.subr.mxu0 0.0
  %63 = vmatpush1.msra.mxu0 0.0
  %64 = vmatprep.subr.mxu0 0.0
  %65 = vmatpush1.msra.mxu0 0.0
  %66 = vmatprep.subr.mxu0 0.0
  %67 = vmatpush1.msra.mxu0 0.0
  %68 = vmatprep.subr.mxu0 0.0
  %69 = vmatpush1.msra.mxu0 0.0
  %70 = vmatprep.subr.mxu0 0.0
  %71 = vmatpush1.msra.mxu0 0.0
  %72 = vmatprep.subr.mxu0 0.0
  %73 = vmatpush1.msra.mxu0 0.0
  %74 = vmatprep.subr.mxu0 0.0
  %75 = vmatpush1.msra.mxu0 0.0
  %76 = vmatprep.subr.mxu0 0.0
  %77 = vmatpush1.msra.mxu0 0.0
  %78 = vmatprep.subr.mxu0 0.0
  %79 = vmatpush1.msra.mxu0 0.0
  %80 = vmatprep.subr.mxu0 0.0
  %81 = vmatpush1.msra.mxu0 0.0
  %82 = vmatprep.subr.mxu0 0.0
  %83 = vmatpush1.msra.mxu0 0.0
  %84 = vmatprep.subr.mxu0 0.0
  %85 = vmatpush1.msra.mxu0 0.0
  %86 = vmatprep.subr.mxu0 0.0
  %87 = vmatpush1.msra.mxu0 0.0
  %88 = vmatprep.subr.mxu0 0.0
  %89 = vmatpush1.msra.mxu0 0.0
  %90 = vmatprep.subr.mxu0 0.0
  %91 = vmatpush1.msra.mxu0 0.0
  %92 = vmatprep.subr.mxu0 0.0
  %93 = vmatpush1.msra.mxu0 0.0
  %94 = vmatprep.subr.mxu0 0.0
  %95 = vmatpush1.msra.mxu0 0.0
  %96 = vmatprep.subr.mxu0 0.0
  %97 = vmatpush1.msra.mxu0 0.0
  %98 = vmatprep.subr.mxu0 0.0
  %99 = vmatpush1.msra.mxu0 0.0
  %100 = vmatprep.subr.mxu0 0.0
  %101 = vmatpush1.msra.mxu0 0.0
  %102 = vmatprep.subr.mxu0 0.0
  %103 = vmatpush1.msra.mxu0 0.0
  %104 = vmatprep.subr.mxu0 0.0
  %105 = vmatpush1.msra.mxu0 0.0
  %106 = vmatprep.subr.mxu0 0.0
  %107 = vmatpush1.msra.mxu0 0.0
  %108 = vmatprep.subr.mxu0 0.0
  %109 = vmatpush1.msra.mxu0 0.0
  %110 = vmatprep.subr.mxu0 0.0
  %111 = vmatpush1.msra.mxu0 0.0
  %112 = vmatprep.subr.mxu0 0.0
  %113 = vmatpush1.msra.mxu0 0.0
  %114 = vmatprep.subr.mxu0 0.0
  %115 = vmatpush1.msra.mxu0 0.0
  %116 = vmatprep.mubr.f32.mxu0 0.0
  %117 = vmatmul.mubr.f32.gmra.mrb[0].mxu0 %v29
  %v118 = vpop.f32.mrb[0].mxu0
  %v119 = vadd.f32 0.0, %v118
  %v120 = vpop.f32.mrb[0].mxu0
  %121 = vmatprep.mubr.f32.mxu0 0.0
  %122 = vmatmul.mubr.f32.gmra.mrb[0].mxu0 %v32
  %v123 = vpop.f32.mrb[0].mxu0
  %v124 = vadd.f32 0.0, %v123
  %v125 = vpop.f32.mrb[0].mxu0
  %126 = vmatprep.mubr.f32.mxu0 0.0
  %127 = vmatmul.mubr.f32.gmra.mrb[0].mxu0 %v35
  %v128 = vpop.f32.mrb[0].mxu0
  %v129 = vadd.f32 0.0, %v128
  %v130 = vpop.f32.mrb[0].mxu0
  %131 = vmatprep.mubr.f32.mxu0 0.0
  %132 = vmatmul.mubr.f32.gmra.mrb[0].mxu0 %v38
  %v133 = vpop.f32.mrb[0].mxu0
  %v134 = vadd.f32 0.0, %v133
  %v135 = vpop.f32.mrb[0].mxu0
  %136 = vmatprep.mubr.f32.mxu0 0.0
  %137 = vmatmul.mubr.f32.gmra.mrb[0].mxu0 %v41
  %v138 = vpop.f32.mrb[0].mxu0
  %v139 = vadd.f32 0.0, %v138
  %v140 = vpop.f32.mrb[0].mxu0
  %141 = vmatprep.mubr.f32.mxu0 0.0
  %142 = vmatmul.mubr.f32.gmra.mrb[0].mxu0 %v44
  %v143 = vpop.f32.mrb[0].mxu0
  %v144 = vadd.f32 0.0, %v143
  %v145 = vpop.f32.mrb[0].mxu0
  %146 = vmatprep.mubr.f32.mxu0 0.0
  %147 = vmatmul.mubr.f32.gmra.mrb[0].mxu0 %v47
  %v148 = vpop.f32.mrb[0].mxu0
  %v149 = vadd.f32 0.0, %v148
  %v150 = vpop.f32.mrb[0].mxu0
  %151 = vmatprep.mubr.f32.mxu0 0.0
  %152 = vmatmul.mubr.f32.gmra.mrb[0].mxu0 %v50
  %v153 = vpop.f32.mrb[0].mxu0
  %v154 = vadd.f32 0.0, %v153
  %v155 = vpop.f32.mrb[0].mxu0
  %156 = vdwg.mxu0
  %v157 = vmul.f32 %v119, %v119
  %v158 = vmul.f32 %v124, %v124
  %v159 = vmul.f32 %v129, %v129
  %v160 = vmul.f32 %v134, %v134
  %v161 = vmul.f32 %v139, %v139
  %v162 = vmul.f32 %v144, %v144
  %v163 = vmul.f32 %v149, %v149
  %v164 = vmul.f32 %v154, %v154
  %173 = vrot.lane.b32.xlu0 %v157, 96
  %v174 = vpop.permute.xlu0 %173
  %175 = vrot.lane.b32.xlu0 %v158, 96
  %v176 = vpop.permute.xlu0 %175
  %177 = vrot.lane.b32.xlu0 %v159, 96
  %v178 = vpop.permute.xlu0 %177
  %179 = vrot.lane.b32.xlu0 %v160, 96
  %v180 = vpop.permute.xlu0 %179
  %181 = vrot.lane.b32.xlu0 %v161, 96
  %v182 = vpop.permute.xlu0 %181
  %183 = vrot.lane.b32.xlu0 %v162, 96
  %v184 = vpop.permute.xlu0 %183
  %185 = vrot.lane.b32.xlu0 %v163, 96
  %v186 = vpop.permute.xlu0 %185
  %187 = vrot.lane.b32.xlu0 %v164, 96
  %v188 = vpop.permute.xlu0 %187
  %v197 = vadd.f32 %v157, %v174
  %v198 = vadd.f32 %v158, %v176
  %v199 = vadd.f32 %v159, %v178
  %v200 = vadd.f32 %v160, %v180
  %v201 = vadd.f32 %v161, %v182
  %v202 = vadd.f32 %v162, %v184
  %v203 = vadd.f32 %v163, %v186
  %v204 = vadd.f32 %v164, %v188
  %v205 = vrsqrt.pop %v197
  %v206 = vmul.f32 %v197, %v205
  %vm207 = vcmp.eq.f32.partialorder %v197, inf
  %v208 = vsel %vm207, %v197, %v206
  %vm209 = vcmp.eq.f32.partialorder %v197, 0.0
  %v210 = vand.u32 %v197, 2147483648
  %v211 = vsel %vm209, %v210, %v208
  %v212 = vrsqrt.pop %v198
  %v213 = vmul.f32 %v198, %v212
  %vm214 = vcmp.eq.f32.partialorder %v198, inf
  %v215 = vsel %vm214, %v198, %v213
  %vm216 = vcmp.eq.f32.partialorder %v198, 0.0
  %v217 = vand.u32 %v198, 2147483648
  %v218 = vsel %vm216, %v217, %v215
  %v219 = vrsqrt.pop %v199
  %v220 = vmul.f32 %v199, %v219
  %vm221 = vcmp.eq.f32.partialorder %v199, inf
  %v222 = vsel %vm221, %v199, %v220
  %vm223 = vcmp.eq.f32.partialorder %v199, 0.0
  %v224 = vand.u32 %v199, 2147483648
  %v225 = vsel %vm223, %v224, %v222
  %v226 = vrsqrt.pop %v200
  %v227 = vmul.f32 %v200, %v226
  %vm228 = vcmp.eq.f32.partialorder %v200, inf
  %v229 = vsel %vm228, %v200, %v227
  %vm230 = vcmp.eq.f32.partialorder %v200, 0.0
  %v231 = vand.u32 %v200, 2147483648
  %v232 = vsel %vm230, %v231, %v229
  %v233 = vrsqrt.pop %v201
  %v234 = vmul.f32 %v201, %v233
  %vm235 = vcmp.eq.f32.partialorder %v201, inf
  %v236 = vsel %vm235, %v201, %v234
  %vm237 = vcmp.eq.f32.partialorder %v201, 0.0
  %v238 = vand.u32 %v201, 2147483648
  %v239 = vsel %vm237, %v238, %v236
  %v240 = vrsqrt.pop %v202
  %v241 = vmul.f32 %v202, %v240
  %vm242 = vcmp.eq.f32.partialorder %v202, inf
  %v243 = vsel %vm242, %v202, %v241
  %vm244 = vcmp.eq.f32.partialorder %v202, 0.0
  %v245 = vand.u32 %v202, 2147483648
  %v246 = vsel %vm244, %v245, %v243
  %v247 = vrsqrt.pop %v203
  %v248 = vmul.f32 %v203, %v247
  %vm249 = vcmp.eq.f32.partialorder %v203, inf
  %v250 = vsel %vm249, %v203, %v248
  %vm251 = vcmp.eq.f32.partialorder %v203, 0.0
  %v252 = vand.u32 %v203, 2147483648
  %v253 = vsel %vm251, %v252, %v250
  %v254 = vrsqrt.pop %v204
  %v255 = vmul.f32 %v204, %v254
  %vm256 = vcmp.eq.f32.partialorder %v204, inf
  %v257 = vsel %vm256, %v204, %v255
  %vm258 = vcmp.eq.f32.partialorder %v204, 0.0
  %v259 = vand.u32 %v204, 2147483648
  %v260 = vsel %vm258, %v259, %v257
  %v261 = vld [vmem:[%s3] sm:$0x7]
  %v262 = vld [vmem:[%s2] sm:$0xff]
  %v263 = vld [vmem:[%s2 + $0x8] sm:$0xff]
  %v264 = vld [vmem:[%s2 + $0x10] sm:$0xff]
  %v265 = vld [vmem:[%s2 + $0x18] sm:$0xff]
  %v266 = vlaneseq
  %v267 = vshrl.u32 %v266, 7
  %v268 = vsub.s32 0, %v267
  %v269 = vrot.slane %v261, %v268
  %vm270 = vcmask 261120
  %v272 = vsel %vm270, %v211, 0
  %v275 = vsel %vm270, %v218, 0
  %v278 = vsel %vm270, %v225, 0
  %v281 = vsel %vm270, %v232, 0
  %v284 = vsel %vm270, %v239, 0
  %v287 = vsel %vm270, %v246, 0
  %v290 = vsel %vm270, %v253, 0
  %v293 = vsel %vm270, %v260, 0
  %295 = vmatprep.subr.mxu0 0.0
  %296 = vmatpush1.msra.mxu0 %v262
  %297 = vmatprep.subr.mxu0 0.0
  %298 = vmatpush1.msra.mxu0 %v263
  %299 = vmatprep.subr.mxu0 0.0
  %300 = vmatpush1.msra.mxu0 %v264
  %301 = vmatprep.subr.mxu0 0.0
  %302 = vmatpush1.msra.mxu0 %v265
  %303 = vmatprep.subr.mxu0 0.0
  %304 = vmatpush1.msra.mxu0 0.0
  %305 = vmatprep.subr.mxu0 0.0
  %306 = vmatpush1.msra.mxu0 0.0
  %307 = vmatprep.subr.mxu0 0.0
  %308 = vmatpush1.msra.mxu0 0.0
  %309 = vmatprep.subr.mxu0 0.0
  %310 = vmatpush1.msra.mxu0 0.0
  %311 = vmatprep.subr.mxu0 0.0
  %312 = vmatpush1.msra.mxu0 0.0
  %313 = vmatprep.subr.mxu0 0.0
  %314 = vmatpush1.msra.mxu0 0.0
  %315 = vmatprep.subr.mxu0 0.0
  %316 = vmatpush1.msra.mxu0 0.0
  %317 = vmatprep.subr.mxu0 0.0
  %318 = vmatpush1.msra.mxu0 0.0
  %319 = vmatprep.subr.mxu0 0.0
  %320 = vmatpush1.msra.mxu0 0.0
  %321 = vmatprep.subr.mxu0 0.0
  %322 = vmatpush1.msra.mxu0 0.0
  %323 = vmatprep.subr.mxu0 0.0
  %324 = vmatpush1.msra.mxu0 0.0
  %325 = vmatprep.subr.mxu0 0.0
  %326 = vmatpush1.msra.mxu0 0.0
  %327 = vmatprep.subr.mxu0 0.0
  %328 = vmatpush1.msra.mxu0 0.0
  %329 = vmatprep.subr.mxu0 0.0
  %330 = vmatpush1.msra.mxu0 0.0
  %331 = vmatprep.subr.mxu0 0.0
  %332 = vmatpush1.msra.mxu0 0.0
  %333 = vmatprep.subr.mxu0 0.0
  %334 = vmatpush1.msra.mxu0 0.0
  %335 = vmatprep.subr.mxu0 0.0
  %336 = vmatpush1.msra.mxu0 0.0
  %337 = vmatprep.subr.mxu0 0.0
  %338 = vmatpush1.msra.mxu0 0.0
  %339 = vmatprep.subr.mxu0 0.0
  %340 = vmatpush1.msra.mxu0 0.0
  %341 = vmatprep.subr.mxu0 0.0
  %342 = vmatpush1.msra.mxu0 0.0
  %343 = vmatprep.subr.mxu0 0.0
  %344 = vmatpush1.msra.mxu0 0.0
  %345 = vmatprep.subr.mxu0 0.0
  %346 = vmatpush1.msra.mxu0 0.0
  %347 = vmatprep.subr.mxu0 0.0
  %348 = vmatpush1.msra.mxu0 0.0
  %349 = vmatprep.subr.mxu0 0.0
  %350 = vmatpush1.msra.mxu0 0.0
  %351 = vmatprep.subr.mxu0 0.0
  %352 = vmatpush1.msra.mxu0 0.0
  %353 = vmatprep.subr.mxu0 0.0
  %354 = vmatpush1.msra.mxu0 0.0
  %355 = vmatprep.subr.mxu0 0.0
  %356 = vmatpush1.msra.mxu0 0.0
  %357 = vmatprep.subr.mxu0 0.0
  %358 = vmatpush1.msra.mxu0 0.0
  %359 = vmatprep.mubr.f32.mxu0 0.0
  %360 = vmatmul.mubr.f32.gmra.mrb[0].mxu0 %v272
  %v361 = vpop.f32.mrb[0].mxu0
  %v362 = vadd.f32 %v269, %v361
  %v363 = vpop.f32.mrb[0].mxu0
  %364 = vmatprep.mubr.f32.mxu0 0.0
  %365 = vmatmul.mubr.f32.gmra.mrb[0].mxu0 %v275
  %v366 = vpop.f32.mrb[0].mxu0
  %v367 = vadd.f32 %v269, %v366
  %v368 = vpop.f32.mrb[0].mxu0
  %369 = vmatprep.mubr.f32.mxu0 0.0
  %370 = vmatmul.mubr.f32.gmra.mrb[0].mxu0 %v278
  %v371 = vpop.f32.mrb[0].mxu0
  %v372 = vadd.f32 %v269, %v371
  %v373 = vpop.f32.mrb[0].mxu0
  %374 = vmatprep.mubr.f32.mxu0 0.0
  %375 = vmatmul.mubr.f32.gmra.mrb[0].mxu0 %v281
  %v376 = vpop.f32.mrb[0].mxu0
  %v377 = vadd.f32 %v269, %v376
  %v378 = vpop.f32.mrb[0].mxu0
  %379 = vmatprep.mubr.f32.mxu0 0.0
  %380 = vmatmul.mubr.f32.gmra.mrb[0].mxu0 %v284
  %v381 = vpop.f32.mrb[0].mxu0
  %v382 = vadd.f32 %v269, %v381
  %v383 = vpop.f32.mrb[0].mxu0
  %384 = vmatprep.mubr.f32.mxu0 0.0
  %385 = vmatmul.mubr.f32.gmra.mrb[0].mxu0 %v287
  %v386 = vpop.f32.mrb[0].mxu0
  %v387 = vadd.f32 %v269, %v386
  %v388 = vpop.f32.mrb[0].mxu0
  %389 = vmatprep.mubr.f32.mxu0 0.0
  %390 = vmatmul.mubr.f32.gmra.mrb[0].mxu0 %v290
  %v391 = vpop.f32.mrb[0].mxu0
  %v392 = vadd.f32 %v269, %v391
  %v393 = vpop.f32.mrb[0].mxu0
  %394 = vmatprep.mubr.f32.mxu0 0.0
  %395 = vmatmul.mubr.f32.gmra.mrb[0].mxu0 %v293
  %v396 = vpop.f32.mrb[0].mxu0
  %v397 = vadd.f32 %v269, %v396
  %v398 = vpop.f32.mrb[0].mxu0
  %399 = vdwg.mxu0
  %v400 = vmax.f32 %v362, 0.0
  %v401 = vmax.f32 %v367, 0.0
  %v402 = vmax.f32 %v372, 0.0
  %v403 = vmax.f32 %v377, 0.0
  %v404 = vmax.f32 %v382, 0.0
  %v405 = vmax.f32 %v387, 0.0
  %v406 = vmax.f32 %v392, 0.0
  %v407 = vmax.f32 %v397, 0.0
  %v408 = vsel %vm270, %v400, 0.0
  %v409 = vsel %vm270, %v401, 0.0
  %v410 = vadd.f32 %v408, %v409
  %v411 = vsel %vm270, %v402, 0.0
  %v412 = vadd.f32 %v410, %v411
  %v413 = vsel %vm270, %v403, 0.0
  %v414 = vadd.f32 %v412, %v413
  %v415 = vrot.slane %v414, 4
  %v416 = vadd.f32 %v414, %v415
  %v417 = vrot.slane %v416, 2
  %v418 = vadd.f32 %v416, %v417
  %v419 = vrot.slane %v418, 1
  %v420 = vadd.f32 %v418, %v419
  %v421 = vsel %vm270, %v404, 0.0
  %v422 = vsel %vm270, %v405, 0.0
  %v423 = vadd.f32 %v421, %v422
  %v424 = vsel %vm270, %v406, 0.0
  %v425 = vadd.f32 %v423, %v424
  %v426 = vsel %vm270, %v407, 0.0
  %v427 = vadd.f32 %v425, %v426
  %v428 = vrot.slane %v427, 4
  %v429 = vadd.f32 %v427, %v428
  %v430 = vrot.slane %v429, 2
  %v431 = vadd.f32 %v429, %v430
  %v432 = vrot.slane %v431, 1
  %v433 = vadd.f32 %v431, %v432
  %v434 = vrcp.pop 32.0
  %v435 = vmul.f32 %v420, %v434
  %v436 = vmul.f32 %v433, %v434
  %v437 = vlaneseq
  %v438 = vshrl.u32 %v437, 7
  %v439 = vsub.s32 1, %v438
  %v440 = vrot.slane %v261, %v439
  %v441 = vmul.f32 %v435, %v440
  %v442 = vmul.f32 %v436, %v440
  %v445 = vrot.slane %v442, 7
  %vm446 = vcmask 1041409
  %v447 = vsel %vm446, %v445, %v441
  %vm449 = vcmask 254976
  %v450 = vsel %vm449, %v447, 0.0
  %451 = vadd.xlane.f32.xlu0 %v450
  %v452 = vpop.xlane.xlu0 %451
  %v453 = vlaneseq
  %v454 = vshrl.u32 %v453, 7
  %v455 = vsub.s32 2, %v454
  %v456 = vrot.slane %v261, %v455
  %v457 = vadd.f32 %v452, %v456
  %vm458 = vcmask 1024
  %459 = vst.msk [vmem:[%s4] sm:$0x3] %vm458, %v457
  // Predicated region
  $region18: #{model_e2e_forward.1} parent=0 // pred_check
    _
  $region19: #{model_e2e_forward.1} parent=0 // pred_check_branch
    %461 = sbr.rel (0) target = $region21
  $region20: #{model_e2e_forward.1} parent=0 // pred_region
    _
  $region21: #{model_e2e_forward.1} parent=0 // pred_fallthru
    _
  // Predicated region
  $region22: #{model_e2e_forward.1} parent=0 // pred_check
    _
  $region23: #{model_e2e_forward.1} parent=0 // pred_check_branch
    %463 = sbr.rel (0) target = $region25
  $region24: #{model_e2e_forward.1} parent=0 // pred_region
    _
  $region25: #{model_e2e_forward.1} parent=0 // pred_fallthru
    _

</llo_original>
